<compile_context>
chip_gen: v7x
topology: tpu7x:2x2x1
jax: 0.10.0
libtpu: 0.0.40
codegen_flags: <defaults>
</compile_context>

<pallas_src>
import functools

import jax
import jax.numpy as jnp
from jax.experimental import pallas as pl
from jax.experimental.pallas import tpu as pltpu

_MASK_VALUE = -1e30  # finite "minus infinity" for masked logits


def _round_up(x, m):
    return (x + m - 1) // m * m


# ---------------------------------------------------------------------------
# Kernel 1: fused row projection.
#   w_ref columns: [0:f_pad) = W (zero-padded), f_pad = W@a1, f_pad+1 = W@a2.
#   One MXU pass produces h (bf16) and the (tq, 128) score slab.
# ---------------------------------------------------------------------------
def _proj_kernel(x_ref, w_ref, h_ref, s_ref):
    f_pad = h_ref.shape[1]
    hcat = jnp.dot(x_ref[...], w_ref[...], preferred_element_type=jnp.float32)
    h_ref[...] = hcat[:, :f_pad].astype(h_ref.dtype)      # bf16 h (halves HBM stream)
    s_ref[...] = hcat[:, f_pad:]                           # lane-dense score slab


# ---------------------------------------------------------------------------
# Kernel 2: masked attention aggregation (flash-style online max shift).
# ---------------------------------------------------------------------------
def _attn_kernel(s1_ref, s2_ref, adj_ref, h_ref, out_ref, m_ref, l_ref,
                 *, alpha, concat, block_k, h_resident):
    k = pl.program_id(1)

    @pl.when(k == 0)
    def _():
        m_ref[...] = jnp.full_like(m_ref, _MASK_VALUE)
        l_ref[...] = jnp.zeros_like(l_ref)
        out_ref[...] = jnp.zeros_like(out_ref)

    mask = adj_ref[...] != 0                                  # int8 compare, no f32 cast
    logits = s1_ref[...] + s2_ref[...]                        # [tq,1] + [1,tk]
    lrelu = jnp.where(logits > 0, logits, alpha * logits)     # LeakyReLU(alpha)
    score = jnp.where(mask, -lrelu, _MASK_VALUE)              # e = exp(score)

    # Online row-max shift (exact for the normalized result).  exp(m_prev-m_new)
    # with m_prev == -1e30 relies on clean f32 underflow to 0 on the first
    # non-empty tile -- intentional, do not "fix".
    m_prev = m_ref[...]
    m_new = jnp.maximum(m_prev, jnp.max(score, axis=-1, keepdims=True))
    rescale = jnp.exp(m_prev - m_new)
    p = jnp.where(mask, jnp.exp(score - m_new), 0.0)
    # TODO(synk): dropout on edge_e omitted (eval-mode identity).

    l_ref[...] = rescale * l_ref[...] + jnp.sum(p, axis=-1, keepdims=True)

    if h_resident:
        start = pl.multiple_of(k * block_k, block_k)
        h_blk = h_ref[pl.ds(start, block_k), :]               # slice of resident h
    else:
        h_blk = h_ref[...]                                    # streamed key tile

    # bf16 x bf16 MXU matmul, f32 accumulation; accumulate directly into the
    # resident output block (valid while out dtype is f32).
    out_ref[...] = rescale * out_ref[...] + jnp.dot(
        p.astype(jnp.bfloat16), h_blk, preferred_element_type=jnp.float32)
    m_ref[...] = m_new

    @pl.when(k == pl.num_programs(1) - 1)
    def _():
        l_safe = jnp.maximum(l_ref[...], 1e-30)               # all-masked rows -> 0, not NaN
        hp = out_ref[...] * pl.reciprocal(l_safe, approx=True)  # EUP, not VPU divide
        if concat:
            # inf-safe ELU: never exponentiates the (discarded) positive branch
            hp = jnp.where(hp > 0, hp, jnp.exp(jnp.minimum(hp, 0.0)) - 1.0)
        out_ref[...] = hp.astype(out_ref.dtype)


def sp_graph_attention_layer(x, adj, W, a, *, alpha, concat=True,
                             block_q=256, block_k=1024, h_resident=None):
    """Forward pass of SpGraphAttentionLayer (eval mode).

    x: [N, in_features] f32, adj: [N, N] (nonzero = edge, any dtype),
    W: [in_features, out_features], a: [1, 2*out_features].
    Returns [N, out_features] f32.
    """
    N, in_f = x.shape
    out_f = W.shape[1]

    f_pad = _round_up(max(out_f, 128), 128)
    # TODO(synk): for small out_features, pack multiple GAT heads along the
    # feature axis instead of zero-padding a single head to 128 lanes.

    # --- tile sizes / independent row & col padding ---------------------------
    tq = min(_round_up(block_q, 128), _round_up(N, 128))
    tk = min(_round_up(block_k, 128), _round_up(N, 128))
    # v7x has 2 TensorCores: keep >= 2 tiles on the "parallel" row axis.
    while tq > 128 and _round_up(N, tq) // tq < 2:
        tq = max(128, _round_up(tq // 2, 128))
    n_rows = _round_up(N, tq)
    n_cols = _round_up(N, tk)

    if h_resident is None:
        # Keep full (bf16) h resident in VMEM if its double-buffered footprint
        # fits comfortably; otherwise stream it per key tile.
        h_resident = 2 * n_cols * f_pad * 2 <= (24 << 20)

    x_p = jnp.pad(x.astype(jnp.float32), ((0, n_rows - N), (0, 0)))
    # int8 adjacency mask: 4x less HBM traffic than f32 for the dominant N^2 stream.
    # TODO(synk): bit-pack adj to 1 bit/edge for bandwidth-bound v5e graphs.
    adj_i8 = jnp.pad((adj != 0).astype(jnp.int8),
                     ((0, n_rows - N), (0, n_cols - N)))

    # Augmented projection matrix [ W | 0 | W@a1 | W@a2 | 0 ].
    W32 = W.astype(jnp.float32)
    a32 = a.astype(jnp.float32)
    wa1 = W32 @ a32[:, :out_f].T            # [in_f, 1]
    wa2 = W32 @ a32[:, out_f:].T            # [in_f, 1]
    w_aug = jnp.zeros((in_f, f_pad + 128), jnp.float32)
    w_aug = w_aug.at[:, :out_f].set(W32)
    w_aug = w_aug.at[:, f_pad].set(wa1[:, 0])
    w_aug = w_aug.at[:, f_pad + 1].set(wa2[:, 0])

    # --- kernel 1: h (bf16) + score slab --------------------------------------
    h, s = pl.pallas_call(
        _proj_kernel,
        out_shape=(jax.ShapeDtypeStruct((n_rows, f_pad), jnp.bfloat16),
                   jax.ShapeDtypeStruct((n_rows, 128), jnp.float32)),
        grid=(n_rows // tq,),
        in_specs=[pl.BlockSpec((tq, in_f), lambda i: (i, 0)),
                  pl.BlockSpec((in_f, f_pad + 128), lambda i: (0, 0))],
        out_specs=(pl.BlockSpec((tq, f_pad), lambda i: (i, 0)),
                   pl.BlockSpec((tq, 128), lambda i: (i, 0))),
        compiler_params=pltpu.CompilerParams(dimension_semantics=("parallel",)),
    )(x_p, w_aug)

    s1 = s[:, 0:1]                           # [n_rows, 1]  (row-side scores)
    s2_row = s[:, 1].reshape(1, n_rows)      # [1, n_rows]  (key-side scores)
    if n_cols > n_rows:
        s2_row = jnp.pad(s2_row, ((0, 0), (0, n_cols - n_rows)))
        h_keys = jnp.pad(h, ((0, n_cols - n_rows), (0, 0)))
    else:
        s2_row = s2_row[:, :n_cols]
        h_keys = h[:n_cols]

    if h_resident:
        h_spec = pl.BlockSpec((n_cols, f_pad), lambda i, k: (0, 0))   # DMA'd once
        h_vmem_bytes = n_cols * f_pad * 2
    else:
        h_spec = pl.BlockSpec((tk, f_pad), lambda i, k: (k, 0))       # streamed
        h_vmem_bytes = tk * f_pad * 2

    # Explicit VMEM budget (each BlockSpec operand double-buffered).
    vmem_bytes = (2 * h_vmem_bytes          # h
                  + 2 * tq * tk             # adj tile (int8)
                  + 2 * (tq + tk) * 4       # s1, s2 tiles
                  + 2 * tq * f_pad * 4      # out tile (accumulator)
                  + 2 * tq * 4)             # m, l scratch
    vmem_limit = int(min(64 << 20, max(32 << 20, vmem_bytes + (4 << 20))))

    # --- kernel 2: masked attention + aggregation ------------------------------
    kernel = functools.partial(_attn_kernel, alpha=float(alpha), concat=concat,
                               block_k=tk, h_resident=h_resident)
    out = pl.pallas_call(
        kernel,
        out_shape=jax.ShapeDtypeStruct((n_rows, f_pad), jnp.float32),
        grid=(n_rows // tq, n_cols // tk),
        in_specs=[pl.BlockSpec((tq, 1), lambda i, k: (i, 0)),     # s1 (row tile)
                  pl.BlockSpec((1, tk), lambda i, k: (0, k)),     # s2 (key tile)
                  pl.BlockSpec((tq, tk), lambda i, k: (i, k)),    # adj tile (int8)
                  h_spec],                                        # h (resident/streamed)
        out_specs=pl.BlockSpec((tq, f_pad), lambda i, k: (i, 0)),
        scratch_shapes=[pltpu.VMEM((tq, 1), jnp.float32),         # m (running max)
                        pltpu.VMEM((tq, 1), jnp.float32)],        # l (rowsum)
        compiler_params=pltpu.CompilerParams(
            dimension_semantics=("parallel", "arbitrary"),
            vmem_limit_bytes=vmem_limit),
    )(s1, s2_row, adj_i8, h_keys)

    return out[:N, :out_f]


# ---------------------------------------------------------------------------
# Pure-JAX reference mirroring the PyTorch forward (eval mode)
# ---------------------------------------------------------------------------
def _reference(x, adj, W, a, *, alpha, concat=True):
    out_f = W.shape[1]
    h = x @ W
    s1 = h @ a[:, :out_f].T          # [N, 1]
    s2 = h @ a[:, out_f:].T          # [N, 1]
    logits = s1 + s2.T
    lrelu = jnp.where(logits > 0, logits, alpha * logits)
    e = jnp.where(adj != 0.0, jnp.exp(-lrelu), 0.0)
    rowsum = e.sum(-1, keepdims=True)
    hp = (e @ h) / rowsum
    return jax.nn.elu(hp) if concat else hp


def _xavier_normal(key, shape, gain):
    fan_out, fan_in = shape[0], shape[1]   # PyTorch 2-D convention
    std = gain * (2.0 / (fan_in + fan_out)) ** 0.5
    return std * jax.random.normal(key, shape, dtype=jnp.float32)


if __name__ == "__main__":
    N, in_features, out_features = 384, 16, 16
    alpha = 0.2

    key = jax.random.PRNGKey(0)
    kx, kadj, kw, ka = jax.random.split(key, 4)

    # Deterministic parameter init (xavier_normal_, gain=1.414), as in __init__.
    W = _xavier_normal(kw, (in_features, out_features), gain=1.414)
    a = _xavier_normal(ka, (1, 2 * out_features), gain=1.414)

    # Random node features and a random sparse adjacency with self-loops
    # (self-loops guarantee nonzero row sums, as the module assumes).
    x = jax.random.normal(kx, (N, in_features), dtype=jnp.float32)
    adj = (jax.random.uniform(kadj, (N, N)) < 0.1).astype(jnp.float32)
    adj = jnp.maximum(adj, jnp.eye(N, dtype=jnp.float32))

    ref = _reference(x, adj, W, a, alpha=alpha, concat=True)

    # Small tiles so the demo exercises the multi-key-tile online-softmax path
    # (init / accumulate / finalize) and >= 2 row tiles; resident-h path.
    out = sp_graph_attention_layer(x, adj, W, a, alpha=alpha, concat=True,
                                   block_q=128, block_k=128)
    out = jax.block_until_ready(out)
    assert out.shape == (N, out_features)
    # Tolerance accounts for bf16 h / bf16 p in the MXU matmul and the approx
    # reciprocal in the epilogue (f32 accumulators throughout).
    err = float(jnp.max(jnp.abs(out - ref)))
    assert jnp.allclose(out, ref, atol=3e-2, rtol=2e-2), err

    # Also exercise the streamed-h fallback (used when the full h does not fit
    # resident in VMEM for very large graphs).
    out2 = sp_graph_attention_layer(x, adj, W, a, alpha=alpha, concat=True,
                                    block_q=128, block_k=128, h_resident=False)
    out2 = jax.block_until_ready(out2)
    err2 = float(jnp.max(jnp.abs(out2 - ref)))
    assert jnp.allclose(out2, ref, atol=3e-2, rtol=2e-2), err2

    print("KERNEL_OK")
</pallas_src>

<mosaic_0001>
module attributes {stable_mosaic.version = 11 : i64} {
  func.func @_proj_kernel(%arg0: i32, %arg1: memref<128x16xf32, #tpu.memory_space<vmem>>, %arg2: memref<16x256xf32, #tpu.memory_space<vmem>>, %arg3: memref<128x128xbf16, #tpu.memory_space<vmem>>, %arg4: memref<128x128xf32, #tpu.memory_space<vmem>>) attributes {dimension_semantics = [#tpu.dimension_semantics<parallel>], iteration_bounds = array<i64: 3>, scalar_prefetch = 0 : i64, scratch_operands = 0 : i64, tpu.core_type = #tpu.core_type<tc>, window_params = [{transform_indices = @transform_0, window_bounds = array<i64: 128, 16>}, {pipeline_mode = #tpu.pipeline_mode<synchronous>, transform_indices = @transform_1, window_bounds = array<i64: 16, 256>}, {transform_indices = @transform_2, window_bounds = array<i64: 128, 128>}, {transform_indices = @transform_3, window_bounds = array<i64: 128, 128>}]} {
    %c0 = arith.constant 0 : index
    %c0_0 = arith.constant 0 : index
    %0 = vector.load %arg1[%c0, %c0_0] : memref<128x16xf32, #tpu.memory_space<vmem>>, vector<128x16xf32>
    %c0_1 = arith.constant 0 : index
    %c0_2 = arith.constant 0 : index
    %1 = vector.load %arg2[%c0_1, %c0_2] : memref<16x256xf32, #tpu.memory_space<vmem>>, vector<16x256xf32>
    %cst = arith.constant dense<0.000000e+00> : vector<128x256xf32>
    %2 = tpu.matmul %0, %1, %cst {dimension_numbers = #tpu.dot_dimension_numbers<[1], [0], [0], [1], [0, 0, 1, 1], [], []>} : vector<128x16xf32>, vector<16x256xf32>, vector<128x256xf32> -> vector<128x256xf32>
    %3 = vector.extract_strided_slice %2 {offsets = [0, 0], sizes = [128, 128], strides = [1, 1]} : vector<128x256xf32> to vector<128x128xf32>
    %4 = arith.truncf %3 : vector<128x128xf32> to vector<128x128xbf16>
    %c0_3 = arith.constant 0 : index
    %c0_4 = arith.constant 0 : index
    %5 = vector.load %arg3[%c0_3, %c0_4] : memref<128x128xbf16, #tpu.memory_space<vmem>>, vector<128x128xbf16>
    tpu.vector_store %arg3[%c0_3, %c0_4], %4 {strides = array<i32>} : memref<128x128xbf16, #tpu.memory_space<vmem>>, vector<128x128xbf16>,
    %6 = vector.extract_strided_slice %2 {offsets = [0, 128], sizes = [128, 128], strides = [1, 1]} : vector<128x256xf32> to vector<128x128xf32>
    %c0_5 = arith.constant 0 : index
    %c0_6 = arith.constant 0 : index
    %7 = vector.load %arg4[%c0_5, %c0_6] : memref<128x128xf32, #tpu.memory_space<vmem>>, vector<128x128xf32>
    tpu.vector_store %arg4[%c0_5, %c0_6], %6 {strides = array<i32>} : memref<128x128xf32, #tpu.memory_space<vmem>>, vector<128x128xf32>,
    return
  }
  func.func @transform_0(%arg0: i32) -> (i32, i32) {
    %c0_i32 = arith.constant 0 : i32
    %c0_i32_0 = arith.constant 0 : i32
    return %arg0, %c0_i32 : i32, i32
  }
  func.func @transform_1(%arg0: i32) -> (i32, i32) {
    %c0_i32 = arith.constant 0 : i32
    %c0_i32_0 = arith.constant 0 : i32
    %c0_i32_1 = arith.constant 0 : i32
    return %c0_i32, %c0_i32_0 : i32, i32
  }
  func.func @transform_2(%arg0: i32) -> (i32, i32) {
    %c0_i32 = arith.constant 0 : i32
    %c0_i32_0 = arith.constant 0 : i32
    return %arg0, %c0_i32 : i32, i32
  }
  func.func @transform_3(%arg0: i32) -> (i32, i32) {
    %c0_i32 = arith.constant 0 : i32
    %c0_i32_0 = arith.constant 0 : i32
    return %arg0, %c0_i32 : i32, i32
  }
}

</mosaic_0001>

<llo_original>
// kernel: tpu_custom_call.1
$region0: #{tpu_custom_call.1}
  #allocation0 [shape = 'u32[]', space=smem, size = 0x4, offset = 0x4, fixed_abs, tag = 'smem constant byte address 0x4 - core index']
  #allocation1 [shape = 'u32[144,128]{1,0:T(1,128)}', space=vmem, size = 0x12000, scoped, tag = 'internal scratch']
  %s0 = inlined_call_operand.vmem [shape: f32[384,16], index: 0, kind: input, shape index: {}]
  %s1 = inlined_call_operand.vmem [shape: f32[16,256], index: 1, kind: input, shape index: {}]
  %s2 = inlined_call_operand.hbm [shape: bf16[384,128], index: 2, kind: output, shape index: {0}]
  %s3 = inlined_call_operand.hbm [shape: f32[384,128], index: 3, kind: output, shape index: {1}]
  %4 = xla_tuple %s2, %s3
  %s5 = sld [smem:[#allocation0]]
  $region49: #{tpu_custom_call.1} parent=0
    _
  %s7 = ssub.s32 1, %s5
  %s8 = scalar_select 0, %s7, %s5
  $region1: #{tpu_custom_call.1} parent=0
    #allocation2 [shape = 'u8[65536]{0}', space=vmem, size = 0x10000, scoped, tag = 'output window, operand 0']
    #allocation3 [shape = 's32[2]{0}', space=sflag, size = 0x8, scoped, tag = 'scoped memory for tpu_custom_call.1']
    #allocation4 [shape = 'u8[131072]{0}', space=vmem, size = 0x20000, scoped, tag = 'output window, operand 1']
    #allocation5 [shape = 's32[2]{0}', space=sflag, size = 0x8, scoped, tag = 'scoped memory for tpu_custom_call.1']
    %9 = vsyncpa [#allocation3], 0
    %s10 = scalar_lea.sflag [#allocation3], 1
    %11 = vsyncpa %s10, 0
    %12 = vsyncpa [#allocation5], 0
    %s13 = scalar_lea.sflag [#allocation5], 1
    %14 = vsyncpa %s13, 0
    loop: start=0, step=1, limit=5
    $region2: #{tpu_custom_call.1} parent=1 // loop_pre_header
      _
    $region3: #{tpu_custom_call.1} parent=1 // loop_header
      %s16 = sphi 0, %s20
      %p17 = scmp.ge.s32.totalorder %s16, 5
      %s26 = sphi 0, %s28
      %s29 = sphi 0, %s26
      %s30 = sphi 0, %s29
      %s46 = sphi 0, %s30
      %s50 = sphi 0, %s50
      %s52 = sphi 0, %s50
      %s53 = sphi 0, %s52
      %s67 = sphi 0, %s53
      %s73 = sphi 0, %s75
      %s76 = sphi 0, %s73
      %s77 = sphi 0, %s76
      %s93 = sphi 0, %s77
      %s99 = sphi 0, %s101
      %s102 = sphi 0, %s99
      %s103 = sphi 0, %s102
      %s119 = sphi 0, %s103
    $region4: #{tpu_custom_call.1} parent=1 // loop_header_branch
      %19 = sbr.rel (%p17) target = $region8
    $region5: #{tpu_custom_call.1} parent=1 // loop_body
      %s21 = ssub.s32 %s16, 1
      %s22 = ssub.s32 %s16, 2
      %s23 = sadd.s32 %s16, 1
      %s24 = ssub.s32 %s16, %s23
      %p25 = scmp.eq.s32.totalorder %s24, 0
      %s27 = sadd.s32 %s26, 1
      %s28 = scalar_select %p25, %s26, %s27
      %p31 = pneg %p25
      %p32 = scmp.eq.s32.totalorder %s16, 2
      %p33 = por %p31, %p32
      %p34 = scmp.ne.s32.totalorder %s26, %s29
      %p35 = scmp.eq.s32.totalorder %s16, 0
      %p36 = por %p34, %p35
      %p37 = scmp.ne.s32.totalorder %s26, %s29
      %p38 = scmp.eq.s32.totalorder %s21, 2
      %p39 = por %p37, %p38
      %p40 = scmp.ne.s32.totalorder %s29, %s30
      %p41 = scmp.eq.s32.totalorder %s21, 0
      %p42 = por %p40, %p41
      %p43 = scmp.ne.s32.totalorder %s29, %s30
      %p44 = scmp.eq.s32.totalorder %s22, 2
      %p45 = por %p43, %p44
      %p47 = scmp.ne.s32.totalorder %s30, %s46
      %p48 = scmp.eq.s32.totalorder %s22, 0
      %p49 = por %p47, %p48
      %s51 = sadd.s32 %s50, 1
      %p54 = scmp.eq.s32.totalorder %s16, 2
      %p55 = scmp.ne.s32.totalorder %s50, %s52
      %p56 = scmp.eq.s32.totalorder %s16, 0
      %p57 = por %p55, %p56
      %p58 = scmp.ne.s32.totalorder %s50, %s52
      %p59 = scmp.eq.s32.totalorder %s21, 2
      %p60 = por %p58, %p59
      %p61 = scmp.ne.s32.totalorder %s52, %s53
      %p62 = scmp.eq.s32.totalorder %s21, 0
      %p63 = por %p61, %p62
      %p64 = scmp.ne.s32.totalorder %s52, %s53
      %p65 = scmp.eq.s32.totalorder %s22, 2
      %p66 = por %p64, %p65
      %p68 = scmp.ne.s32.totalorder %s53, %s67
      %p69 = scmp.eq.s32.totalorder %s22, 0
      %p70 = por %p68, %p69
      %s71 = ssub.s32 %s16, %s23
      %p72 = scmp.eq.s32.totalorder %s71, 0
      %s74 = sadd.s32 %s73, 1
      %s75 = scalar_select %p72, %s73, %s74
      %p78 = pneg %p72
      %p79 = scmp.eq.s32.totalorder %s16, 2
      %p80 = por %p78, %p79
      %p81 = scmp.ne.s32.totalorder %s73, %s76
      %p82 = scmp.eq.s32.totalorder %s16, 0
      %p83 = por %p81, %p82
      %p84 = scmp.ne.s32.totalorder %s73, %s76
      %p85 = scmp.eq.s32.totalorder %s21, 2
      %p86 = por %p84, %p85
      %p87 = scmp.ne.s32.totalorder %s76, %s77
      %p88 = scmp.eq.s32.totalorder %s21, 0
      %p89 = por %p87, %p88
      %p90 = scmp.ne.s32.totalorder %s76, %s77
      %p91 = scmp.eq.s32.totalorder %s22, 2
      %p92 = por %p90, %p91
      %p94 = scmp.ne.s32.totalorder %s77, %s93
      %p95 = scmp.eq.s32.totalorder %s22, 0
      %p96 = por %p94, %p95
      %s97 = ssub.s32 %s16, %s23
      %p98 = scmp.eq.s32.totalorder %s97, 0
      %s100 = sadd.s32 %s99, 1
      %s101 = scalar_select %p98, %s99, %s100
      %p104 = pneg %p98
      %p105 = scmp.eq.s32.totalorder %s16, 2
      %p106 = por %p104, %p105
      %p107 = scmp.ne.s32.totalorder %s99, %s102
      %p108 = scmp.eq.s32.totalorder %s16, 0
      %p109 = por %p107, %p108
      %p110 = scmp.ne.s32.totalorder %s99, %s102
      %p111 = scmp.eq.s32.totalorder %s21, 2
      %p112 = por %p110, %p111
      %p113 = scmp.ne.s32.totalorder %s102, %s103
      %p114 = scmp.eq.s32.totalorder %s21, 0
      %p115 = por %p113, %p114
      %p116 = scmp.ne.s32.totalorder %s102, %s103
      %p117 = scmp.eq.s32.totalorder %s22, 2
      %p118 = por %p116, %p117
      %p120 = scmp.ne.s32.totalorder %s103, %s119
      %p121 = scmp.eq.s32.totalorder %s22, 0
      %p122 = por %p120, %p121
      %p123 = scmp.le.s32.totalorder 1, %s16
      %p124 = scmp.lt.s32.totalorder %s16, 4
      %p125 = pnand %p123, %p124
      %p126 = pneg %p125
      // Predicated region
      $region9: #{tpu_custom_call.1} parent=5 // pred_check
        _
      $region10: #{tpu_custom_call.1} parent=5 // pred_check_branch
        %128 = sbr.rel (%p125) target = $region12
      $region11: #{tpu_custom_call.1} parent=5 // pred_region
        %s129 = ssub.s32 %s16, 1
        // Predicated region
        $region13: #{tpu_custom_call.1} parent=11 // pred_check
          %p130 = pneg %p63
        $region14: #{tpu_custom_call.1} parent=11 // pred_check_branch
          %132 = sbr.rel (%p130) target = $region16
        $region15: #{tpu_custom_call.1} parent=11 // pred_region
          _
        $region16: #{tpu_custom_call.1} parent=11 // pred_fallthru
          _
      $region12: #{tpu_custom_call.1} parent=5 // pred_fallthru
        _
      %p133 = scmp.lt.s32.totalorder %s16, 3
      // Predicated region
      $region17: #{tpu_custom_call.1} parent=5 // pred_check
        %p134 = pneg %p133
      $region18: #{tpu_custom_call.1} parent=5 // pred_check_branch
        %136 = sbr.rel (%p134) target = $region20
      $region19: #{tpu_custom_call.1} parent=5 // pred_region
        // Predicated region
        $region21: #{tpu_custom_call.1} parent=19 // pred_check
          %p137 = pneg %p36
        $region22: #{tpu_custom_call.1} parent=19 // pred_check_branch
          %139 = sbr.rel (%p137) target = $region24
        $region23: #{tpu_custom_call.1} parent=19 // pred_region
          %s140 = smul.u32 16, %s16
          %p141 = scmp.lt.s32.totalorder %s140, 47
          %s142 = scalar_select %p141, %s140, 47
          %s143 = smul.addr %s142, 8
          %s144 = scalar_lea.vmem %s0, %s143
          %s145 = smul.u32 16, %s16
        $region24: #{tpu_custom_call.1} parent=19 // pred_fallthru
          _
      $region20: #{tpu_custom_call.1} parent=5 // pred_fallthru
        _
      %p146 = scmp.le.s32.totalorder 1, %s16
      %p147 = scmp.lt.s32.totalorder %s16, 4
      %p148 = pnand %p146, %p147
      %p149 = pneg %p148
      // Predicated region
      $region25: #{tpu_custom_call.1} parent=5 // pred_check
        _
      $region26: #{tpu_custom_call.1} parent=5 // pred_check_branch
        %151 = sbr.rel (%p148) target = $region28
      $region27: #{tpu_custom_call.1} parent=5 // pred_region
        %s152 = ssub.s32 %s16, 1
        %s153 = smul.u32 16, %s21
        %p154 = scmp.lt.s32.totalorder %s153, 47
        %s155 = scalar_select %p154, %s153, 47
        %s156 = smul.addr %s155, 8
        %s157 = scalar_lea.vmem %s0, %s156
        %p158 = pneg %p42
        %p159 = pneg %p39
        %p160 = pneg %p63
        %p161 = pneg %p60
        %p162 = pneg %p89
        %p163 = pneg %p86
        %s164 = sand.u32 %s76, 1
        %s165 = scalar_lea.sflag [#allocation3], %s164
        %s166 = sand.u32 %s76, 1
        %s167 = smul.addr %s166, 64
        %s168 = scalar_lea.vmem [#allocation2], %s167
        %p169 = pneg %p115
        %p170 = pneg %p112
        %s171 = sand.u32 %s102, 1
        %s172 = scalar_lea.sflag [#allocation5], %s171
        %s173 = sand.u32 %s102, 1
        %s174 = smul.addr %s173, 128
        %s175 = scalar_lea.vmem [#allocation4], %s174
        %s176 = smul.u32 16, %s21
        %p177 = scmp.lt.s32.totalorder %s176, 47
        %s178 = scalar_select %p177, %s176, 47
        %s179 = smul.addr %s178, 8
        %s180 = scalar_lea.vmem %s0, %s179
        %s181 = smul.u32 16, %s21
        %s182 = smul.u32 16, %s21
        %s183 = smul.u32 16, %s21
        %v184 = vld [vmem:[%s180] sm:$0xff]
        %v185 = vld [vmem:[%s180 + $0x8] sm:$0xff]
        %v186 = vld [vmem:[%s180 + $0x10] sm:$0xff]
        %v187 = vld [vmem:[%s180 + $0x18] sm:$0xff]
        %v188 = vld [vmem:[%s180 + $0x20] sm:$0xff]
        %v189 = vld [vmem:[%s180 + $0x28] sm:$0xff]
        %v190 = vld [vmem:[%s180 + $0x30] sm:$0xff]
        %v191 = vld [vmem:[%s180 + $0x38] sm:$0xff]
        %v192 = vld [vmem:[%s180 + $0x40] sm:$0xff]
        %v193 = vld [vmem:[%s180 + $0x48] sm:$0xff]
        %v194 = vld [vmem:[%s180 + $0x50] sm:$0xff]
        %v195 = vld [vmem:[%s180 + $0x58] sm:$0xff]
        %v196 = vld [vmem:[%s180 + $0x60] sm:$0xff]
        %v197 = vld [vmem:[%s180 + $0x68] sm:$0xff]
        %v198 = vld [vmem:[%s180 + $0x70] sm:$0xff]
        %v199 = vld [vmem:[%s180 + $0x78] sm:$0xff]
        %v200 = vld [vmem:[%s1] sm:$0xff]
        %v201 = vld [vmem:[%s1 + $0x8] sm:$0xff]
        %v202 = vld [vmem:[%s1 + $0x10] sm:$0xff]
        %v203 = vld [vmem:[%s1 + $0x18] sm:$0xff]
        %vm204 = vcmask 130048
        %v206 = vsel %vm204, %v184, 0
        %v209 = vsel %vm204, %v185, 0
        %v212 = vsel %vm204, %v186, 0
        %v215 = vsel %vm204, %v187, 0
        %v218 = vsel %vm204, %v188, 0
        %v221 = vsel %vm204, %v189, 0
        %v224 = vsel %vm204, %v190, 0
        %v227 = vsel %vm204, %v191, 0
        %v230 = vsel %vm204, %v192, 0
        %v233 = vsel %vm204, %v193, 0
        %v236 = vsel %vm204, %v194, 0
        %v239 = vsel %vm204, %v195, 0
        %v242 = vsel %vm204, %v196, 0
        %v245 = vsel %vm204, %v197, 0
        %v248 = vsel %vm204, %v198, 0
        %v251 = vsel %vm204, %v199, 0
        %253 = vmatprep.subr.mxu0 %v201
        %254 = vmatpush1.msra.mxu0 %v200
        %255 = vmatprep.subr.mxu0 %v203
        %256 = vmatpush1.msra.mxu0 %v202
        %257 = vmatprep.subr.mxu0 0.0
        %258 = vmatpush1.msra.mxu0 0.0
        %259 = vmatprep.subr.mxu0 0.0
        %260 = vmatpush1.msra.mxu0 0.0
        %261 = vmatprep.subr.mxu0 0.0
        %262 = vmatpush1.msra.mxu0 0.0
        %263 = vmatprep.subr.mxu0 0.0
        %264 = vmatpush1.msra.mxu0 0.0
        %265 = vmatprep.subr.mxu0 0.0
        %266 = vmatpush1.msra.mxu0 0.0
        %267 = vmatprep.subr.mxu0 0.0
        %268 = vmatpush1.msra.mxu0 0.0
        %269 = vmatprep.subr.mxu0 0.0
        %270 = vmatpush1.msra.mxu0 0.0
        %271 = vmatprep.subr.mxu0 0.0
        %272 = vmatpush1.msra.mxu0 0.0
        %273 = vmatprep.subr.mxu0 0.0
        %274 = vmatpush1.msra.mxu0 0.0
        %275 = vmatprep.subr.mxu0 0.0
        %276 = vmatpush1.msra.mxu0 0.0
        %277 = vmatprep.subr.mxu0 0.0
        %278 = vmatpush1.msra.mxu0 0.0
        %279 = vmatprep.subr.mxu0 0.0
        %280 = vmatpush1.msra.mxu0 0.0
        %281 = vmatprep.subr.mxu0 0.0
        %282 = vmatpush1.msra.mxu0 0.0
        %283 = vmatprep.subr.mxu0 0.0
        %284 = vmatpush1.msra.mxu0 0.0
        %285 = vmatprep.subr.mxu0 0.0
        %286 = vmatpush1.msra.mxu0 0.0
        %287 = vmatprep.subr.mxu0 0.0
        %288 = vmatpush1.msra.mxu0 0.0
        %289 = vmatprep.subr.mxu0 0.0
        %290 = vmatpush1.msra.mxu0 0.0
        %291 = vmatprep.subr.mxu0 0.0
        %292 = vmatpush1.msra.mxu0 0.0
        %293 = vmatprep.subr.mxu0 0.0
        %294 = vmatpush1.msra.mxu0 0.0
        %295 = vmatprep.subr.mxu0 0.0
        %296 = vmatpush1.msra.mxu0 0.0
        %297 = vmatprep.subr.mxu0 0.0
        %298 = vmatpush1.msra.mxu0 0.0
        %299 = vmatprep.subr.mxu0 0.0
        %300 = vmatpush1.msra.mxu0 0.0
        %301 = vmatprep.subr.mxu0 0.0
        %302 = vmatpush1.msra.mxu0 0.0
        %303 = vmatprep.subr.mxu0 0.0
        %304 = vmatpush1.msra.mxu0 0.0
        %305 = vmatprep.subr.mxu0 0.0
        %306 = vmatpush1.msra.mxu0 0.0
        %307 = vmatprep.subr.mxu0 0.0
        %308 = vmatpush1.msra.mxu0 0.0
        %309 = vmatprep.subr.mxu0 0.0
        %310 = vmatpush1.msra.mxu0 0.0
        %311 = vmatprep.subr.mxu0 0.0
        %312 = vmatpush1.msra.mxu0 0.0
        %313 = vmatprep.subr.mxu0 0.0
        %314 = vmatpush1.msra.mxu0 0.0
        %315 = vmatprep.subr.mxu0 0.0
        %316 = vmatpush1.msra.mxu0 0.0
        %317 = vmatprep.mubr.f32.mxu0 0.0
        %318 = vmatmul.mubr.f32.gmra.mrb[0].mxu0 %v206
        %v319 = vpop.f32.mrb[0].mxu0
        %v320 = vadd.f32 0.0, %v319
        %v321 = vpop.f32.mrb[0].mxu0
        %v322 = vadd.f32 0.0, %v321
        %323 = vmatprep.mubr.f32.mxu0 0.0
        %324 = vmatmul.mubr.f32.gmra.mrb[0].mxu0 %v209
        %v325 = vpop.f32.mrb[0].mxu0
        %v326 = vadd.f32 0.0, %v325
        %v327 = vpop.f32.mrb[0].mxu0
        %v328 = vadd.f32 0.0, %v327
        %329 = vmatprep.mubr.f32.mxu0 0.0
        %330 = vmatmul.mubr.f32.gmra.mrb[0].mxu0 %v212
        %v331 = vpop.f32.mrb[0].mxu0
        %v332 = vadd.f32 0.0, %v331
        %v333 = vpop.f32.mrb[0].mxu0
        %v334 = vadd.f32 0.0, %v333
        %335 = vmatprep.mubr.f32.mxu0 0.0
        %336 = vmatmul.mubr.f32.gmra.mrb[0].mxu0 %v215
        %v337 = vpop.f32.mrb[0].mxu0
        %v338 = vadd.f32 0.0, %v337
        %v339 = vpop.f32.mrb[0].mxu0
        %v340 = vadd.f32 0.0, %v339
        %341 = vmatprep.mubr.f32.mxu0 0.0
        %342 = vmatmul.mubr.f32.gmra.mrb[0].mxu0 %v218
        %v343 = vpop.f32.mrb[0].mxu0
        %v344 = vadd.f32 0.0, %v343
        %v345 = vpop.f32.mrb[0].mxu0
        %v346 = vadd.f32 0.0, %v345
        %347 = vmatprep.mubr.f32.mxu0 0.0
        %348 = vmatmul.mubr.f32.gmra.mrb[0].mxu0 %v221
        %v349 = vpop.f32.mrb[0].mxu0
        %v350 = vadd.f32 0.0, %v349
        %v351 = vpop.f32.mrb[0].mxu0
        %v352 = vadd.f32 0.0, %v351
        %353 = vmatprep.mubr.f32.mxu0 0.0
        %354 = vmatmul.mubr.f32.gmra.mrb[0].mxu0 %v224
        %v355 = vpop.f32.mrb[0].mxu0
        %v356 = vadd.f32 0.0, %v355
        %v357 = vpop.f32.mrb[0].mxu0
        %v358 = vadd.f32 0.0, %v357
        %359 = vmatprep.mubr.f32.mxu0 0.0
        %360 = vmatmul.mubr.f32.gmra.mrb[0].mxu0 %v227
        %v361 = vpop.f32.mrb[0].mxu0
        %v362 = vadd.f32 0.0, %v361
        %v363 = vpop.f32.mrb[0].mxu0
        %v364 = vadd.f32 0.0, %v363
        %365 = vmatprep.mubr.f32.mxu0 0.0
        %366 = vmatmul.mubr.f32.gmra.mrb[0].mxu0 %v230
        %v367 = vpop.f32.mrb[0].mxu0
        %v368 = vadd.f32 0.0, %v367
        %v369 = vpop.f32.mrb[0].mxu0
        %v370 = vadd.f32 0.0, %v369
        %371 = vmatprep.mubr.f32.mxu0 0.0
        %372 = vmatmul.mubr.f32.gmra.mrb[0].mxu0 %v233
        %v373 = vpop.f32.mrb[0].mxu0
        %v374 = vadd.f32 0.0, %v373
        %v375 = vpop.f32.mrb[0].mxu0
        %v376 = vadd.f32 0.0, %v375
        %377 = vmatprep.mubr.f32.mxu0 0.0
        %378 = vmatmul.mubr.f32.gmra.mrb[0].mxu0 %v236
        %v379 = vpop.f32.mrb[0].mxu0
        %v380 = vadd.f32 0.0, %v379
        %v381 = vpop.f32.mrb[0].mxu0
        %v382 = vadd.f32 0.0, %v381
        %383 = vmatprep.mubr.f32.mxu0 0.0
        %384 = vmatmul.mubr.f32.gmra.mrb[0].mxu0 %v239
        %v385 = vpop.f32.mrb[0].mxu0
        %v386 = vadd.f32 0.0, %v385
        %v387 = vpop.f32.mrb[0].mxu0
        %v388 = vadd.f32 0.0, %v387
        %389 = vmatprep.mubr.f32.mxu0 0.0
        %390 = vmatmul.mubr.f32.gmra.mrb[0].mxu0 %v242
        %v391 = vpop.f32.mrb[0].mxu0
        %v392 = vadd.f32 0.0, %v391
        %v393 = vpop.f32.mrb[0].mxu0
        %v394 = vadd.f32 0.0, %v393
        %395 = vmatprep.mubr.f32.mxu0 0.0
        %396 = vmatmul.mubr.f32.gmra.mrb[0].mxu0 %v245
        %v397 = vpop.f32.mrb[0].mxu0
        %v398 = vadd.f32 0.0, %v397
        %v399 = vpop.f32.mrb[0].mxu0
        %v400 = vadd.f32 0.0, %v399
        %401 = vmatprep.mubr.f32.mxu0 0.0
        %402 = vmatmul.mubr.f32.gmra.mrb[0].mxu0 %v248
        %v403 = vpop.f32.mrb[0].mxu0
        %v404 = vadd.f32 0.0, %v403
        %v405 = vpop.f32.mrb[0].mxu0
        %v406 = vadd.f32 0.0, %v405
        %407 = vmatprep.mubr.f32.mxu0 0.0
        %408 = vmatmul.mubr.f32.gmra.mrb[0].mxu0 %v251
        %v409 = vpop.f32.mrb[0].mxu0
        %v410 = vadd.f32 0.0, %v409
        %v411 = vpop.f32.mrb[0].mxu0
        %v412 = vadd.f32 0.0, %v411
        %413 = vdwg.mxu0
        %v414 = vpack.c.bf16 %v326, %v320
        %v415 = vpack.c.bf16 %v338, %v332
        %v416 = vpack.c.bf16 %v350, %v344
        %v417 = vpack.c.bf16 %v362, %v356
        %v418 = vpack.c.bf16 %v374, %v368
        %v419 = vpack.c.bf16 %v386, %v380
        %v420 = vpack.c.bf16 %v398, %v392
        %v421 = vpack.c.bf16 %v410, %v404
        %v430 = vunpack.c.l.b16 %v414
        %v431 = vunpack.c.h.b16 %v414
        %v432 = vunpack.c.l.b16 %v415
        %v433 = vunpack.c.h.b16 %v415
        %v434 = vunpack.c.l.b16 %v416
        %v435 = vunpack.c.h.b16 %v416
        %v436 = vunpack.c.l.b16 %v417
        %v437 = vunpack.c.h.b16 %v417
        %v438 = vunpack.c.l.b16 %v418
        %v439 = vunpack.c.h.b16 %v418
        %v440 = vunpack.c.l.b16 %v419
        %v441 = vunpack.c.h.b16 %v419
        %v442 = vunpack.c.l.b16 %v420
        %v443 = vunpack.c.h.b16 %v420
        %v444 = vunpack.c.l.b16 %v421
        %v445 = vunpack.c.h.b16 %v421
        %v446 = vpack.c.b16 %v430, %v430
        %v447 = vpack.c.b16 %v431, %v431
        %v448 = vpack.c.b16 %v432, %v432
        %v449 = vpack.c.b16 %v433, %v433
        %v450 = vpack.c.b16 %v434, %v434
        %v451 = vpack.c.b16 %v435, %v435
        %v452 = vpack.c.b16 %v436, %v436
        %v453 = vpack.c.b16 %v437, %v437
        %v454 = vpack.c.b16 %v438, %v438
        %v455 = vpack.c.b16 %v439, %v439
        %v456 = vpack.c.b16 %v440, %v440
        %v457 = vpack.c.b16 %v441, %v441
        %v458 = vpack.c.b16 %v442, %v442
        %v459 = vpack.c.b16 %v443, %v443
        %v460 = vpack.c.b16 %v444, %v444
        %v461 = vpack.c.b16 %v445, %v445
        %478 = vst [vmem:[%s168] sm:$0xf] %v446
        %479 = vst [vmem:[%s168 + $0x4] sm:$0xf] %v447
        %480 = vst [vmem:[%s168 + $0x8] sm:$0xf] %v448
        %481 = vst [vmem:[%s168 + $0xc] sm:$0xf] %v449
        %482 = vst [vmem:[%s168 + $0x10] sm:$0xf] %v450
        %483 = vst [vmem:[%s168 + $0x14] sm:$0xf] %v451
        %484 = vst [vmem:[%s168 + $0x18] sm:$0xf] %v452
        %485 = vst [vmem:[%s168 + $0x1c] sm:$0xf] %v453
        %486 = vst [vmem:[%s168 + $0x20] sm:$0xf] %v454
        %487 = vst [vmem:[%s168 + $0x24] sm:$0xf] %v455
        %488 = vst [vmem:[%s168 + $0x28] sm:$0xf] %v456
        %489 = vst [vmem:[%s168 + $0x2c] sm:$0xf] %v457
        %490 = vst [vmem:[%s168 + $0x30] sm:$0xf] %v458
        %491 = vst [vmem:[%s168 + $0x34] sm:$0xf] %v459
        %492 = vst [vmem:[%s168 + $0x38] sm:$0xf] %v460
        %493 = vst [vmem:[%s168 + $0x3c] sm:$0xf] %v461
        %494 = vst [vmem:[%s175] sm:$0xff] %v322
        %495 = vst [vmem:[%s175 + $0x8] sm:$0xff] %v328
        %496 = vst [vmem:[%s175 + $0x10] sm:$0xff] %v334
        %497 = vst [vmem:[%s175 + $0x18] sm:$0xff] %v340
        %498 = vst [vmem:[%s175 + $0x20] sm:$0xff] %v346
        %499 = vst [vmem:[%s175 + $0x28] sm:$0xff] %v352
        %500 = vst [vmem:[%s175 + $0x30] sm:$0xff] %v358
        %501 = vst [vmem:[%s175 + $0x38] sm:$0xff] %v364
        %502 = vst [vmem:[%s175 + $0x40] sm:$0xff] %v370
        %503 = vst [vmem:[%s175 + $0x48] sm:$0xff] %v376
        %504 = vst [vmem:[%s175 + $0x50] sm:$0xff] %v382
        %505 = vst [vmem:[%s175 + $0x58] sm:$0xff] %v388
        %506 = vst [vmem:[%s175 + $0x60] sm:$0xff] %v394
        %507 = vst [vmem:[%s175 + $0x68] sm:$0xff] %v400
        %508 = vst [vmem:[%s175 + $0x70] sm:$0xff] %v406
        %509 = vst [vmem:[%s175 + $0x78] sm:$0xff] %v412
        %s510 = sand.u32 %s76, 1
        %s511 = scalar_lea.sflag [#allocation3], %s510
        %s512 = sand.u32 %s76, 1
        %s513 = smul.addr %s512, 64
        %s514 = scalar_lea.vmem [#allocation2], %s513
        %s515 = sand.u32 %s102, 1
        %s516 = scalar_lea.sflag [#allocation5], %s515
        %s517 = sand.u32 %s102, 1
        %s518 = smul.addr %s517, 128
        %s519 = scalar_lea.vmem [#allocation4], %s518
        // Predicated region
        $region29: #{tpu_custom_call.1} parent=27 // pred_check
          %p520 = pneg %p86
        $region30: #{tpu_custom_call.1} parent=27 // pred_check_branch
          %522 = sbr.rel (%p520) target = $region32
        $region31: #{tpu_custom_call.1} parent=27 // pred_region
          %s523 = smul.u32 16, %s21
          %s525 = ssub.s32 1024, 1024
          %526 = vsyncadd %s511, %s525
          %s527 = smul.addr %s523, 64
          %s528 = scalar_lea.hbm %s2, %s527
          %s529 = sshll.u32 %s514, 4
          %s530 = int_to_ptr.vmem [resolvable:$true] %s529
          %535 = dma.vmem_to_hbm [thread:$0]  %s530, 1024, %s528, %s511, 64, 64, 4
        $region32: #{tpu_custom_call.1} parent=27 // pred_fallthru
          _
        // Predicated region
        $region33: #{tpu_custom_call.1} parent=27 // pred_check
          %p536 = pneg %p112
        $region34: #{tpu_custom_call.1} parent=27 // pred_check_branch
          %538 = sbr.rel (%p536) target = $region36
        $region35: #{tpu_custom_call.1} parent=27 // pred_region
          %s539 = smul.u32 16, %s21
          %s541 = ssub.s32 2048, 2048
          %542 = vsyncadd %s516, %s541
          %s543 = smul.addr %s539, 128
          %s544 = scalar_lea.hbm %s3, %s543
          %s545 = sshll.u32 %s519, 4
          %s546 = int_to_ptr.vmem [resolvable:$true] %s545
          %551 = dma.vmem_to_hbm [thread:$0]  %s546, 2048, %s544, %s516, 128, 128, 8
        $region36: #{tpu_custom_call.1} parent=27 // pred_fallthru
          _
      $region28: #{tpu_custom_call.1} parent=5 // pred_fallthru
        _
      %p552 = scmp.le.s32.totalorder 2, %s16
      // Predicated region
      $region37: #{tpu_custom_call.1} parent=5 // pred_check
        %p553 = pneg %p552
      $region38: #{tpu_custom_call.1} parent=5 // pred_check_branch
        %555 = sbr.rel (%p553) target = $region40
      $region39: #{tpu_custom_call.1} parent=5 // pred_region
        %s556 = ssub.s32 %s16, 2
        // Predicated region
        $region41: #{tpu_custom_call.1} parent=39 // pred_check
          %p557 = pneg %p92
        $region42: #{tpu_custom_call.1} parent=39 // pred_check_branch
          %559 = sbr.rel (%p557) target = $region44
        $region43: #{tpu_custom_call.1} parent=39 // pred_region
          %s560 = sand.u32 %s77, 1
          %s561 = scalar_lea.sflag [#allocation3], %s560
          %s562 = sand.u32 %s77, 1
          %s563 = smul.addr %s562, 64
          %s564 = scalar_lea.vmem [#allocation2], %s563
          %565 = dma.done %s561, 1024
        $region44: #{tpu_custom_call.1} parent=39 // pred_fallthru
          _
        // Predicated region
        $region45: #{tpu_custom_call.1} parent=39 // pred_check
          %p566 = pneg %p118
        $region46: #{tpu_custom_call.1} parent=39 // pred_check_branch
          %568 = sbr.rel (%p566) target = $region48
        $region47: #{tpu_custom_call.1} parent=39 // pred_region
          %s569 = sand.u32 %s103, 1
          %s570 = scalar_lea.sflag [#allocation5], %s569
          %s571 = sand.u32 %s103, 1
          %s572 = smul.addr %s571, 128
          %s573 = scalar_lea.vmem [#allocation4], %s572
          %574 = dma.done %s570, 2048
        $region48: #{tpu_custom_call.1} parent=39 // pred_fallthru
          _
      $region40: #{tpu_custom_call.1} parent=5 // pred_fallthru
        _
    $region6: #{tpu_custom_call.1} parent=1 // loop_footer
      %s20 = sadd.s32 1, %s16
    $region7: #{tpu_custom_call.1} parent=1 // loop_footer_branch
      %15 = sbr.rel target = $region3
    $region8: #{tpu_custom_call.1} parent=1 // loop_exit
      _
    %575 = vsyncpa [#allocation3], 1
    %s576 = scalar_lea.sflag [#allocation3], 1
    %577 = vsyncpa %s576, 1
    %578 = vsyncpa [#allocation5], 1
    %s579 = scalar_lea.sflag [#allocation5], 1
    %580 = vsyncpa %s579, 1

</llo_original>
